<compile_context>
chip_gen: v6e
topology: v6e:2x2x1
jax: 0.10.0
libtpu: 0.0.40
codegen_flags: <defaults>
</compile_context>

<pallas_src>
import math
from functools import partial

import jax
import jax.numpy as jnp
from jax.experimental import pallas as pl
from jax.experimental.pallas import tpu as pltpu

NUM_GAUSSIANS = 50
START = 0.0
STOP = 5.0
EPS = 1e-6


def _smearing_kernel(dist_ref, offset_ref, o_ref, *, coeff):
    # dist_ref:   (1, tile_n)  f32  -- distances, lane-dense
    # offset_ref: (G, 1)       f32  -- offsets with -EPS already folded in
    # o_ref:      (G, tile_n)  f32  -- transposed output tile, lane-dense
    d = dist_ref[...]                 # (1, tile_n)
    off = offset_ref[...]             # (G, 1)
    diff = d - off                    # broadcast -> (G, tile_n); == d - off + EPS
    o_ref[...] = jnp.exp(coeff * diff * diff)


def gaussian_smearing(dist, offset, coeff, *, tile_n=4096, transpose_output=True):
    """dist: arbitrary-shape float array of distances.

    Returns (dist.size, NUM_GAUSSIANS) f32 by default (matches the torch
    forward). With transpose_output=False, returns the lane-dense (G, N)
    layout with no extra XLA pass (preferred when the consumer can fuse it).
    """
    flat = dist.reshape(-1).astype(jnp.float32)
    n = flat.shape[0]
    g = offset.shape[0]

    # Lane-align the tile; clamp tile size for small inputs so padding stays
    # bounded, otherwise use the large default for bandwidth efficiency.
    tile_n = max(128, (tile_n // 128) * 128)
    n_aligned = ((n + 127) // 128) * 128
    tile = min(tile_n, n_aligned)
    n_pad = ((n + tile - 1) // tile) * tile
    if n_pad != n:
        flat = jnp.pad(flat, (0, n_pad - n))

    dist_row = flat.reshape(1, n_pad)
    # Fold the +EPS into the offsets:  (d - off) + EPS == d - (off - EPS)
    offset_col = (offset.astype(jnp.float32) - EPS).reshape(g, 1)

    out = pl.pallas_call(
        partial(_smearing_kernel, coeff=float(coeff)),
        out_shape=jax.ShapeDtypeStruct((g, n_pad), jnp.float32),
        grid_spec=pltpu.PrefetchScalarGridSpec(
            num_scalar_prefetch=0,
            grid=(n_pad // tile,),
            in_specs=[
                pl.BlockSpec((1, tile), lambda i: (0, i)),   # dist row tile
                pl.BlockSpec((g, 1), lambda i: (0, 0)),      # offsets (resident)
            ],
            out_specs=pl.BlockSpec((g, tile), lambda i: (0, i)),
        ),
        compiler_params=pltpu.CompilerParams(
            dimension_semantics=("parallel",),  # shards across TCs on v7x
        ),
    )(dist_row, offset_col)

    if transpose_output:
        # Match torch layout (N, G); XLA fuses the slice with the transpose.
        return out[:, :n].T
    return out[:, :n]


if __name__ == "__main__":
    # deterministic "parameters" (buffer) exactly as the module __init__ builds them
    offset = jnp.linspace(START, STOP, NUM_GAUSSIANS)
    step = (STOP - START) / (NUM_GAUSSIANS - 1)
    coeff = -0.5 / (step ** 2)

    # small deterministic example: a batch of pairwise-style distances
    key = jax.random.PRNGKey(0)
    dist = jax.random.uniform(key, (256,), minval=0.0, maxval=5.0, dtype=jnp.float32)

    out = gaussian_smearing(dist, offset, coeff)
    out = jax.block_until_ready(out)

    # reference check (pure JAX, mirrors the torch forward)
    d = dist.reshape(-1, 1) - offset.reshape(1, -1) + EPS
    ref = jnp.exp(coeff * d * d)
    assert out.shape == (256, NUM_GAUSSIANS)
    assert jnp.max(jnp.abs(out - ref)) < 1e-5

    # also check the lane-dense (G, N) path used by fused consumers
    out_t = jax.block_until_ready(
        gaussian_smearing(dist, offset, coeff, transpose_output=False))
    assert out_t.shape == (NUM_GAUSSIANS, 256)
    assert jnp.max(jnp.abs(out_t.T - ref)) < 1e-5

    print("KERNEL_OK")
</pallas_src>

<mosaic_0001>
module attributes {stable_mosaic.version = 11 : i64} {
  func.func @_smearing_kernel(%arg0: i32, %arg1: memref<1x256xf32, #tpu.memory_space<vmem>>, %arg2: memref<50x1xf32, #tpu.memory_space<vmem>>, %arg3: memref<50x256xf32, #tpu.memory_space<vmem>>) attributes {dimension_semantics = [#tpu.dimension_semantics<parallel>], iteration_bounds = array<i64: 1>, scalar_prefetch = 0 : i64, scratch_operands = 0 : i64, tpu.core_type = #tpu.core_type<tc>, window_params = [{transform_indices = @transform_0, window_bounds = array<i64: 1, 256>}, {pipeline_mode = #tpu.pipeline_mode<synchronous>, transform_indices = @transform_1, window_bounds = array<i64: 50, 1>}, {transform_indices = @transform_2, window_bounds = array<i64: 50, 256>}]} {
    %c0 = arith.constant 0 : index
    %c0_0 = arith.constant 0 : index
    %0 = vector.load %arg1[%c0, %c0_0] : memref<1x256xf32, #tpu.memory_space<vmem>>, vector<1x256xf32>
    %c0_1 = arith.constant 0 : index
    %c0_2 = arith.constant 0 : index
    %1 = vector.load %arg2[%c0_1, %c0_2] : memref<50x1xf32, #tpu.memory_space<vmem>>, vector<50x1xf32>
    %2 = vector.broadcast %0 : vector<1x256xf32> to vector<50x256xf32>
    %3 = vector.broadcast %1 : vector<50x1xf32> to vector<50x256xf32>
    %4 = arith.subf %2, %3 : vector<50x256xf32>
    %cst = arith.constant -4.802000e+01 : f32
    %5 = vector.broadcast %cst : f32 to vector<50x256xf32>
    %6 = arith.mulf %5, %4 : vector<50x256xf32>
    %7 = arith.mulf %6, %4 : vector<50x256xf32>
    %8 = math.exp %7 : vector<50x256xf32>
    %c0_3 = arith.constant 0 : index
    %c0_4 = arith.constant 0 : index
    %9 = vector.load %arg3[%c0_3, %c0_4] : memref<50x256xf32, #tpu.memory_space<vmem>>, vector<50x256xf32>
    tpu.vector_store %arg3[%c0_3, %c0_4], %8 {strides = array<i32>} : memref<50x256xf32, #tpu.memory_space<vmem>>, vector<50x256xf32>,
    return
  }
  func.func @transform_0(%arg0: i32) -> (i32, i32) {
    %c0_i32 = arith.constant 0 : i32
    %c0_i32_0 = arith.constant 0 : i32
    return %c0_i32, %arg0 : i32, i32
  }
  func.func @transform_1(%arg0: i32) -> (i32, i32) {
    %c0_i32 = arith.constant 0 : i32
    %c0_i32_0 = arith.constant 0 : i32
    %c0_i32_1 = arith.constant 0 : i32
    return %c0_i32, %c0_i32_0 : i32, i32
  }
  func.func @transform_2(%arg0: i32) -> (i32, i32) {
    %c0_i32 = arith.constant 0 : i32
    %c0_i32_0 = arith.constant 0 : i32
    return %c0_i32, %arg0 : i32, i32
  }
}

</mosaic_0001>

<llo_original>
// kernel: tpu_custom_call.1
$region0: #{tpu_custom_call.1}
  #allocation0 [shape = 'u32[]', space=smem, size = 0x4, offset = 0x4, fixed_abs, tag = 'smem constant byte address 0x4 - core index']
  #allocation1 [shape = 'u32[144,128]{1,0:T(1,128)}', space=vmem, size = 0x12000, scoped, tag = 'internal scratch']
  %s0 = inlined_call_operand.vmem [shape: f32[1,256], index: 0, kind: input, shape index: {}]
  %s1 = inlined_call_operand.vmem [shape: f32[50,1], index: 1, kind: input, shape index: {}]
  %s2 = inlined_call_operand.hbm [shape: f32[50,256], index: 2, kind: output, shape index: {}]
  %s3 = sld [smem:[#allocation0]]
  $region18: #{tpu_custom_call.1} parent=0
    _
  %s5 = ssub.s32 1, %s3
  %s6 = scalar_select 0, %s5, %s3
  $region1: #{tpu_custom_call.1} parent=0
    #allocation2 [shape = 'u8[57344]{0}', space=vmem, size = 0xe000, scoped, tag = 'output window, operand 0, single buffered']
    #allocation3 [shape = 's32[1]{0}', space=sflag, size = 0x4, scoped, tag = 'scoped memory for tpu_custom_call.1']
    %7 = vsyncpa [#allocation3], 0
    // Predicated region
    $region2: #{tpu_custom_call.1} parent=1 // pred_check
      _
    $region3: #{tpu_custom_call.1} parent=1 // pred_check_branch
      %9 = sbr.rel (0) target = $region5
    $region4: #{tpu_custom_call.1} parent=1 // pred_region
      _
    $region5: #{tpu_custom_call.1} parent=1 // pred_fallthru
      _
    // Predicated region
    $region6: #{tpu_custom_call.1} parent=1 // pred_check
      _
    $region7: #{tpu_custom_call.1} parent=1 // pred_check_branch
      %11 = sbr.rel (0) target = $region9
    $region8: #{tpu_custom_call.1} parent=1 // pred_region
      _
    $region9: #{tpu_custom_call.1} parent=1 // pred_fallthru
      _
    %v12 = vld [vmem:[%s0] sm:$0x3]
    %v13 = vld [vmem:[%s1] sm:$0xff]
    %v14 = vld [vmem:[%s1 + $0x8] sm:$0xff]
    %v15 = vld [vmem:[%s1 + $0x10] sm:$0xff]
    %v16 = vld [vmem:[%s1 + $0x18] sm:$0xff]
    %v17 = vld [vmem:[%s1 + $0x20] sm:$0xff]
    %v18 = vld [vmem:[%s1 + $0x28] sm:$0xff]
    %v19 = vld [vmem:[%s1 + $0x30] sm:$0x3]
    %v21 = vlaneseq
    %v22 = vshrl.u32 %v21, 7
    %v23 = vsub.s32 0, %v22
    %v24 = vrot.slane %v12, %v23
    %v25 = vlaneseq
    %v26 = vshrl.u32 %v25, 7
    %v27 = vsub.s32 1, %v26
    %v28 = vrot.slane %v12, %v27
    %32 = vset.pattern.permute.xlu0 0
    %33 = vperm.xlu0 %32, %v13
    %v34 = vpop.permute.xlu0 %33
    %37 = vset.pattern.permute.xlu0 0
    %38 = vperm.xlu0 %37, %v14
    %v39 = vpop.permute.xlu0 %38
    %42 = vset.pattern.permute.xlu0 0
    %43 = vperm.xlu0 %42, %v15
    %v44 = vpop.permute.xlu0 %43
    %47 = vset.pattern.permute.xlu0 0
    %48 = vperm.xlu0 %47, %v16
    %v49 = vpop.permute.xlu0 %48
    %52 = vset.pattern.permute.xlu0 0
    %53 = vperm.xlu0 %52, %v17
    %v54 = vpop.permute.xlu0 %53
    %57 = vset.pattern.permute.xlu0 0
    %58 = vperm.xlu0 %57, %v18
    %v59 = vpop.permute.xlu0 %58
    %62 = vset.pattern.permute.xlu0 0
    %63 = vperm.xlu0 %62, %v19
    %v64 = vpop.permute.xlu0 %63
    %v66 = vsub.f32 %v24, %v34
    %v67 = vsub.f32 %v28, %v34
    %v68 = vsub.f32 %v24, %v39
    %v69 = vsub.f32 %v28, %v39
    %v70 = vsub.f32 %v24, %v44
    %v71 = vsub.f32 %v28, %v44
    %v72 = vsub.f32 %v24, %v49
    %v73 = vsub.f32 %v28, %v49
    %v74 = vsub.f32 %v24, %v54
    %v75 = vsub.f32 %v28, %v54
    %v76 = vsub.f32 %v24, %v59
    %v77 = vsub.f32 %v28, %v59
    %v78 = vsub.f32 %v24, %v64
    %v79 = vsub.f32 %v28, %v64
    %v80 = vmul.f32 %v66, -48.02
    %v81 = vmul.f32 %v67, -48.02
    %v82 = vmul.f32 %v68, -48.02
    %v83 = vmul.f32 %v69, -48.02
    %v84 = vmul.f32 %v70, -48.02
    %v85 = vmul.f32 %v71, -48.02
    %v86 = vmul.f32 %v72, -48.02
    %v87 = vmul.f32 %v73, -48.02
    %v88 = vmul.f32 %v74, -48.02
    %v89 = vmul.f32 %v75, -48.02
    %v90 = vmul.f32 %v76, -48.02
    %v91 = vmul.f32 %v77, -48.02
    %v92 = vmul.f32 %v78, -48.02
    %v93 = vmul.f32 %v79, -48.02
    %v94 = vmul.f32 %v80, %v66
    %v95 = vmul.f32 %v81, %v67
    %v96 = vmul.f32 %v82, %v68
    %v97 = vmul.f32 %v83, %v69
    %v98 = vmul.f32 %v84, %v70
    %v99 = vmul.f32 %v85, %v71
    %v100 = vmul.f32 %v86, %v72
    %v101 = vmul.f32 %v87, %v73
    %v102 = vmul.f32 %v88, %v74
    %v103 = vmul.f32 %v89, %v75
    %v104 = vmul.f32 %v90, %v76
    %v105 = vmul.f32 %v91, %v77
    %v106 = vmul.f32 %v92, %v78
    %v107 = vmul.f32 %v93, %v79
    %v108 = vmul.f32 %v94, 1.442695
    %v109 = vpow.pop %v108
    %v110 = vmul.f32 %v95, 1.442695
    %v111 = vpow.pop %v110
    %v112 = vmul.f32 %v96, 1.442695
    %v113 = vpow.pop %v112
    %v114 = vmul.f32 %v97, 1.442695
    %v115 = vpow.pop %v114
    %v116 = vmul.f32 %v98, 1.442695
    %v117 = vpow.pop %v116
    %v118 = vmul.f32 %v99, 1.442695
    %v119 = vpow.pop %v118
    %v120 = vmul.f32 %v100, 1.442695
    %v121 = vpow.pop %v120
    %v122 = vmul.f32 %v101, 1.442695
    %v123 = vpow.pop %v122
    %v124 = vmul.f32 %v102, 1.442695
    %v125 = vpow.pop %v124
    %v126 = vmul.f32 %v103, 1.442695
    %v127 = vpow.pop %v126
    %v128 = vmul.f32 %v104, 1.442695
    %v129 = vpow.pop %v128
    %v130 = vmul.f32 %v105, 1.442695
    %v131 = vpow.pop %v130
    %v132 = vmul.f32 %v106, 1.442695
    %v133 = vpow.pop %v132
    %v134 = vmul.f32 %v107, 1.442695
    %v135 = vpow.pop %v134
    %136 = vst [vmem:[#allocation2] sm:$0xff] %v109
    %137 = vst [vmem:[#allocation2 + $0x8] sm:$0xff] %v111
    %138 = vst [vmem:[#allocation2 + $0x10] sm:$0xff] %v113
    %139 = vst [vmem:[#allocation2 + $0x18] sm:$0xff] %v115
    %140 = vst [vmem:[#allocation2 + $0x20] sm:$0xff] %v117
    %141 = vst [vmem:[#allocation2 + $0x28] sm:$0xff] %v119
    %142 = vst [vmem:[#allocation2 + $0x30] sm:$0xff] %v121
    %143 = vst [vmem:[#allocation2 + $0x38] sm:$0xff] %v123
    %144 = vst [vmem:[#allocation2 + $0x40] sm:$0xff] %v125
    %145 = vst [vmem:[#allocation2 + $0x48] sm:$0xff] %v127
    %146 = vst [vmem:[#allocation2 + $0x50] sm:$0xff] %v129
    %147 = vst [vmem:[#allocation2 + $0x58] sm:$0xff] %v131
    %148 = vst [vmem:[#allocation2 + $0x60] sm:$0x3] %v133
    %149 = vst [vmem:[#allocation2 + $0x68] sm:$0x3] %v135
    // Predicated region
    $region10: #{tpu_custom_call.1} parent=1 // pred_check
      _
    $region11: #{tpu_custom_call.1} parent=1 // pred_check_branch
      %151 = sbr.rel (0) target = $region13
    $region12: #{tpu_custom_call.1} parent=1 // pred_region
      %s153 = ssub.s32 1792, 1792
      %154 = vsyncadd [#allocation3], %s153
      %s155 = sshll.u32 [#allocation2], 4
      %s156 = int_to_ptr.vmem [resolvable:$true] %s155
      %161 = dma.vmem_to_hbm [thread:$0]  %s156, 1792, %s2, [#allocation3], 256, 256, 16
    $region13: #{tpu_custom_call.1} parent=1 // pred_fallthru
      _
    // Predicated region
    $region14: #{tpu_custom_call.1} parent=1 // pred_check
      _
    $region15: #{tpu_custom_call.1} parent=1 // pred_check_branch
      %163 = sbr.rel (0) target = $region17
    $region16: #{tpu_custom_call.1} parent=1 // pred_region
      %164 = dma.done [#allocation3], 1792
    $region17: #{tpu_custom_call.1} parent=1 // pred_fallthru
      _
    %165 = vsyncpa [#allocation3], 1

</llo_original>
